<compile_context>
chip_gen: v6e
topology: v6e:2x2x1
jax: 0.10.0
libtpu: 0.0.40
codegen_flags: <defaults>
</compile_context>

<pallas_src>
import jax
import jax.numpy as jnp
from jax.experimental import pallas as pl
from jax.experimental.pallas import tpu as pltpu

_LANE = 128
_TILE_BYTES = 8 * 1024 * 1024        # per-buffer tile target (see header)
_VMEM_LIMIT = 48 * 1024 * 1024       # > v5e 16 MiB default, < v7x 64 MiB physical


def _temp_scale_kernel(t_ref, x_ref, o_ref):
    # t_ref: (1, 1) f32 scalar in SMEM; x_ref / o_ref: (ROWS_TILE, WIDTH) VMEM tiles.
    inv = 1.0 / jnp.abs(t_ref[0, 0])               # scalar reciprocal, broadcast
    o_ref[...] = (x_ref[...] * inv).astype(o_ref.dtype)


def _round_up(a, b):
    return -(-a // b) * b


def _sublane(itemsize):
    # Native packed sublane multiple per dtype width (f32:8, bf16:16, int8/fp8:32).
    return {4: 8, 2: 16, 1: 32}.get(itemsize, 8)


def _pick_width(n, sub):
    """Largest lane-dense width in {4096..128} that exactly divides n (no padding)."""
    best = None
    for cand in (4096, 2048, 1024, 512, 256, 128):
        if n % cand == 0:
            if n // cand >= sub:        # prefer widths giving >= one full sublane tile
                return cand
            if best is None:
                best = cand
    return best                          # None => n not a multiple of 128


def temp_scaler_forward(x, T):
    """z = x / |T|  (TempScaler.forward).  x: any float array; T: shape (1,)."""
    orig_shape, orig_dtype = x.shape, x.dtype
    n = x.size
    itemsize = jnp.dtype(orig_dtype).itemsize
    sub = _sublane(itemsize)
    width = _pick_width(n, sub)

    if width is None or n < _LANE * sub:
        # Tiny or 128-misaligned inputs: fused XLA elementwise beats any
        # pallas_call that would need pad + slice HBM round trips.
        return (x / jnp.abs(T)).astype(orig_dtype)

    rows = n // width
    x2d = x.reshape(rows, width)                    # contiguous reshape: no copy

    # Row tiling: target ~_TILE_BYTES per buffer, aligned to packed sublanes.
    target_rows = max(sub, ((_TILE_BYTES // itemsize) // width) // sub * sub)
    if rows > target_rows:
        rows_tile = target_rows                     # grid >= 2, ragged tail masked
    else:
        rows_tile = rows                            # single block == full array dims
        # v7x megacore: split mid-size single tiles across both TensorCores.
        if rows >= 2 * sub and rows * width * itemsize >= 2 * 1024 * 1024:
            rows_tile = _round_up(pl.cdiv(rows, 2), sub)
    grid = (pl.cdiv(rows, rows_tile),)

    t2d = T.reshape(1, 1).astype(jnp.float32)

    out2d = pl.pallas_call(
        _temp_scale_kernel,
        out_shape=jax.ShapeDtypeStruct((rows, width), orig_dtype),
        grid=grid,
        in_specs=[
            pl.BlockSpec(memory_space=pltpu.SMEM),               # T scalar (untiled)
            pl.BlockSpec((rows_tile, width), lambda i: (i, 0)),  # x tile
        ],
        out_specs=pl.BlockSpec((rows_tile, width), lambda i: (i, 0)),
        compiler_params=pltpu.CompilerParams(
            dimension_semantics=("parallel",),                   # v7x: both TCs
            vmem_limit_bytes=_VMEM_LIMIT),
        cost_estimate=pl.CostEstimate(
            flops=n, transcendentals=0, bytes_accessed=2 * n * itemsize),
    )(t2d, x2d)

    return out2d.reshape(orig_shape)


if __name__ == "__main__":
    key = jax.random.PRNGKey(0)
    kx, _ = jax.random.split(key)

    # NCHW input, small shape (numel = 2048 -> lane-dense 8 x 256 slab, no padding)
    x = jax.random.normal(kx, (2, 4, 16, 16), dtype=jnp.float32)

    # T as initialized by the module (ones(1)), plus a non-trivial value to
    # actually exercise the abs + scale.
    for T in (jnp.ones((1,), dtype=jnp.float32),
              jnp.array([-1.7], dtype=jnp.float32)):
        z = temp_scaler_forward(x, T)
        jax.block_until_ready(z)

        z_ref = x / jnp.abs(T)
        assert z.shape == x.shape and z.dtype == x.dtype
        assert jnp.allclose(z, z_ref, atol=1e-6, rtol=1e-6)

    print("KERNEL_OK")
</pallas_src>

<mosaic_0001>
module attributes {stable_mosaic.version = 11 : i64} {
  func.func @_temp_scale_kernel(%arg0: i32, %arg1: memref<1x1xf32, #tpu.memory_space<smem>>, %arg2: memref<8x256xf32, #tpu.memory_space<vmem>>, %arg3: memref<8x256xf32, #tpu.memory_space<vmem>>) attributes {dimension_semantics = [#tpu.dimension_semantics<parallel>], iteration_bounds = array<i64: 1>, scalar_prefetch = 0 : i64, scratch_operands = 0 : i64, tpu.core_type = #tpu.core_type<tc>, window_params = [{transform_indices = @transform_0, window_bounds = array<i64: 1, 1>}, {transform_indices = @transform_1, window_bounds = array<i64: 8, 256>}, {transform_indices = @transform_2, window_bounds = array<i64: 8, 256>}]} {
    %c0 = arith.constant 0 : index
    %c0_0 = arith.constant 0 : index
    %0 = memref.load %arg1[%c0, %c0_0] : memref<1x1xf32, #tpu.memory_space<smem>>
    %1 = math.absf %0 : f32
    %cst = arith.constant 1.000000e+00 : f32
    %2 = arith.divf %cst, %1 : f32
    %c0_1 = arith.constant 0 : index
    %c0_2 = arith.constant 0 : index
    %3 = vector.load %arg2[%c0_1, %c0_2] : memref<8x256xf32, #tpu.memory_space<vmem>>, vector<8x256xf32>
    %4 = vector.broadcast %2 : f32 to vector<8x256xf32>
    %5 = arith.mulf %3, %4 : vector<8x256xf32>
    %c0_3 = arith.constant 0 : index
    %c0_4 = arith.constant 0 : index
    %6 = vector.load %arg3[%c0_3, %c0_4] : memref<8x256xf32, #tpu.memory_space<vmem>>, vector<8x256xf32>
    tpu.vector_store %arg3[%c0_3, %c0_4], %5 {strides = array<i32>} : memref<8x256xf32, #tpu.memory_space<vmem>>, vector<8x256xf32>,
    return
  }
  func.func @transform_0(%arg0: i32) -> (i32, i32) {
    %c0_i32 = arith.constant 0 : i32
    %c0_i32_0 = arith.constant 0 : i32
    %c0_i32_1 = arith.constant 0 : i32
    return %c0_i32, %c0_i32_0 : i32, i32
  }
  func.func @transform_1(%arg0: i32) -> (i32, i32) {
    %c0_i32 = arith.constant 0 : i32
    %c0_i32_0 = arith.constant 0 : i32
    return %arg0, %c0_i32 : i32, i32
  }
  func.func @transform_2(%arg0: i32) -> (i32, i32) {
    %c0_i32 = arith.constant 0 : i32
    %c0_i32_0 = arith.constant 0 : i32
    return %arg0, %c0_i32 : i32, i32
  }
}

</mosaic_0001>

<llo_original>
// kernel: tpu_custom_call.1
$region0: #{tpu_custom_call.1}
  #allocation0 [shape = 'u32[]', space=smem, size = 0x4, offset = 0x4, fixed_abs, tag = 'smem constant byte address 0x4 - core index']
  #allocation1 [shape = 'u32[144,128]{1,0:T(1,128)}', space=vmem, size = 0x12000, scoped, tag = 'internal scratch']
  #allocation2 [shape = 'f32[1,1]{1,0:T(1,128)S(6)}', space=smem, size = 0x200, scoped, tag = 'scoped memory for tpu_custom_call.1']
  %s0 = inlined_call_operand.<no memory space> [shape: f32[1,1], index: 0, kind: input, shape index: {}]
  %s1 = inlined_call_operand.hbm [shape: f32[8,256], index: 1, kind: input, shape index: {}]
  %s2 = inlined_call_operand.hbm [shape: f32[8,256], index: 2, kind: output, shape index: {}]
  %s3 = sld [smem:[#allocation0]]
  $region22: #{tpu_custom_call.1} parent=0
    _
  %s5 = ssub.s32 1, %s3
  %s6 = scalar_select 0, %s5, %s3
  %7 = sst [smem:[#allocation2]] %s0
  $region1: #{tpu_custom_call.1} parent=0
    #allocation3 [shape = 'u8[8192]{0}', space=vmem, size = 0x2000, scoped, tag = 'input window, operand 1, single buffered']
    #allocation4 [shape = 's32[1]{0}', space=sflag, size = 0x4, scoped, tag = 'scoped memory for tpu_custom_call.1']
    #allocation5 [shape = 's32[1]{0}', space=sflag, size = 0x4, scoped, tag = 'scoped memory for tpu_custom_call.1']
    #allocation6 [shape = 'u8[8192]{0}', space=vmem, size = 0x2000, scoped, tag = 'output window, operand 0, single buffered']
    %8 = vsyncpa [#allocation4], 0
    %9 = vsyncpa [#allocation5], 0
    // Predicated region
    $region2: #{tpu_custom_call.1} parent=1 // pred_check
      _
    $region3: #{tpu_custom_call.1} parent=1 // pred_check_branch
      %11 = sbr.rel (0) target = $region5
    $region4: #{tpu_custom_call.1} parent=1 // pred_region
      _
    $region5: #{tpu_custom_call.1} parent=1 // pred_fallthru
      _
    // Predicated region
    $region6: #{tpu_custom_call.1} parent=1 // pred_check
      _
    $region7: #{tpu_custom_call.1} parent=1 // pred_check_branch
      %13 = sbr.rel (0) target = $region9
    $region8: #{tpu_custom_call.1} parent=1 // pred_region
      %s15 = ssub.s32 256, 256
      %16 = vsyncadd [#allocation4], %s15
      %s18 = sshll.u32 [#allocation3], 4
      %s19 = int_to_ptr.vmem [resolvable:$true] %s18
      %21 = dma.hbm_to_vmem [thread:$0]  %s1, 256, %s19, [#allocation4]
    $region9: #{tpu_custom_call.1} parent=1 // pred_fallthru
      _
    // Predicated region
    $region10: #{tpu_custom_call.1} parent=1 // pred_check
      _
    $region11: #{tpu_custom_call.1} parent=1 // pred_check_branch
      %23 = sbr.rel (0) target = $region13
    $region12: #{tpu_custom_call.1} parent=1 // pred_region
      %24 = dma.done [#allocation4], 256
    $region13: #{tpu_custom_call.1} parent=1 // pred_fallthru
      _
    %s25 = sld [smem:[#allocation2]]
    %s26 = sand.u32 2147483647, %s25
    %v27 = vstv %s26
    %v28 = vrcp.pop %v27
    %s29 = vtos %v28
    %v30 = vld [vmem:[#allocation3] sm:$0xff]
    %v31 = vld [vmem:[#allocation3 + $0x8] sm:$0xff]
    %v32 = vstv %s29
    %v33 = vmul.f32 %v30, %v32
    %v34 = vmul.f32 %v31, %v32
    %35 = vst [vmem:[#allocation6] sm:$0xff] %v33
    %36 = vst [vmem:[#allocation6 + $0x8] sm:$0xff] %v34
    // Predicated region
    $region14: #{tpu_custom_call.1} parent=1 // pred_check
      _
    $region15: #{tpu_custom_call.1} parent=1 // pred_check_branch
      %38 = sbr.rel (0) target = $region17
    $region16: #{tpu_custom_call.1} parent=1 // pred_region
      %s40 = ssub.s32 256, 256
      %41 = vsyncadd [#allocation5], %s40
      %s43 = sshll.u32 [#allocation6], 4
      %s44 = int_to_ptr.vmem [resolvable:$true] %s43
      %46 = dma.vmem_to_hbm [thread:$0]  %s44, 256, %s2, [#allocation5]
    $region17: #{tpu_custom_call.1} parent=1 // pred_fallthru
      _
    // Predicated region
    $region18: #{tpu_custom_call.1} parent=1 // pred_check
      _
    $region19: #{tpu_custom_call.1} parent=1 // pred_check_branch
      %48 = sbr.rel (0) target = $region21
    $region20: #{tpu_custom_call.1} parent=1 // pred_region
      %49 = dma.done [#allocation5], 256
    $region21: #{tpu_custom_call.1} parent=1 // pred_fallthru
      _
    %50 = vsyncpa [#allocation4], 1
    %51 = vsyncpa [#allocation5], 1

</llo_original>
